<compile_context>
chip_gen: v6e
topology: v6e:2x2x1
jax: 0.10.0
libtpu: 0.0.40
codegen_flags: <defaults>
</compile_context>

<pallas_src>
import math
import functools

import jax
import jax.numpy as jnp
from jax import lax
from jax.experimental import pallas as pl
from jax.experimental.pallas import tpu as pltpu


_NEG_BIG = -1e30  # finite "-inf" so fully-masked rows never hit inf-inf NaNs


def _pick_tile(dim, targets):
    """Largest target tile that divides `dim`; fall back to the full dim."""
    for t in targets:
        if dim % t == 0:
            return t
    return dim


# ----------------------------------------------------------------------------
# Tiled linear kernel:  y = x @ W_t + b,  W_t: (Cin, Cout)  (pre-transposed
# nn.Linear weight), f32 accumulation in VMEM scratch, pipelined over M/N/K.
# ----------------------------------------------------------------------------
def _linear_kernel(x_ref, w_ref, b_ref, o_ref, acc_ref):
    @pl.when(pl.program_id(2) == 0)
    def _():
        acc_ref[...] = jnp.zeros_like(acc_ref)

    acc_ref[...] += jnp.dot(x_ref[...], w_ref[...],
                            preferred_element_type=jnp.float32)

    @pl.when(pl.program_id(2) == pl.num_programs(2) - 1)
    def _():
        o_ref[...] = (acc_ref[...] +
                      b_ref[...].astype(jnp.float32)).astype(o_ref.dtype)


def linear(x2d, w_t, b):
    M, K = x2d.shape
    K2, N = w_t.shape
    assert K == K2
    tm = _pick_tile(M, (256, 128, 64, 32, 16, 8))
    tn = _pick_tile(N, (256, 128))       # lane-dense output tiles when possible
    tk = _pick_tile(K, (512, 256, 128))
    grid = (M // tm, N // tn, K // tk)
    return pl.pallas_call(
        _linear_kernel,
        out_shape=jax.ShapeDtypeStruct((M, N), x2d.dtype),
        grid=grid,
        in_specs=[
            pl.BlockSpec((tm, tk), lambda i, j, k: (i, k)),
            pl.BlockSpec((tk, tn), lambda i, j, k: (k, j)),
            pl.BlockSpec((1, tn), lambda i, j, k: (0, j)),
        ],
        out_specs=pl.BlockSpec((tm, tn), lambda i, j, k: (i, j)),
        scratch_shapes=[pltpu.VMEM((tm, tn), jnp.float32)],
        compiler_params=pltpu.CompilerParams(
            dimension_semantics=("parallel", "parallel", "arbitrary")),
    )(x2d, w_t, b.reshape(1, N))


# ----------------------------------------------------------------------------
# Flash-style causal attention.  Grid = (B, H, q_tiles, kv_tiles); running
# softmax statistics in VMEM scratch; tiles above the causal diagonal skipped.
# ----------------------------------------------------------------------------
def _flash_attn_kernel(q_ref, k_ref, v_ref, o_ref, m_ref, l_ref, acc_ref,
                       *, scale, tq, tkv):
    qi = pl.program_id(2)
    ki = pl.program_id(3)

    @pl.when(ki == 0)
    def _():
        m_ref[...] = jnp.full_like(m_ref, _NEG_BIG)
        l_ref[...] = jnp.zeros_like(l_ref)
        acc_ref[...] = jnp.zeros_like(acc_ref)

    # Skip kv tiles entirely above the causal diagonal (>= half of all tiles):
    # no MXU, no exp, no softmax update, and (via the clamped index_map below)
    # no K/V DMA either.
    @pl.when(ki * tkv < (qi + 1) * tq)
    def _():
        q = q_ref[...]                         # (tq, hd)  input dtype (bf16 ok)
        k = k_ref[...]                         # (tkv, hd)
        v = v_ref[...]                         # (tkv, hd)

        # q @ k^T via dimension_numbers (no in-kernel transpose), f32 acc.
        s = lax.dot_general(q, k, (((1,), (1,)), ((), ())),
                            preferred_element_type=jnp.float32) * scale

        # Causal mask — only runs on live (partially/fully unmasked) tiles.
        row = qi * tq + lax.broadcasted_iota(jnp.int32, (tq, tkv), 0)
        col = ki * tkv + lax.broadcasted_iota(jnp.int32, (tq, tkv), 1)
        s = jnp.where(row >= col, s, _NEG_BIG)

        m_prev = m_ref[...]
        m_new = jnp.maximum(m_prev, jnp.max(s, axis=-1, keepdims=True))
        alpha = jnp.exp(m_prev - m_new)
        p = jnp.exp(s - m_new)

        l_ref[...] = alpha * l_ref[...] + jnp.sum(p, axis=-1, keepdims=True)
        acc_ref[...] = alpha * acc_ref[...] + jnp.dot(
            p.astype(v.dtype), v, preferred_element_type=jnp.float32)
        m_ref[...] = m_new

    @pl.when(ki == pl.num_programs(3) - 1)
    def _():
        # Fold the softmax denominator into the (tq, hd) output (EUP recip).
        o_ref[...] = (acc_ref[...] *
                      pl.reciprocal(l_ref[...], approx=True)).astype(o_ref.dtype)


def flash_causal_attention(q, k, v):
    B, H, T, hd = q.shape
    scale = 1.0 / math.sqrt(hd)
    tq = _pick_tile(T, (256, 128, 64, 32, 16, 8))
    tkv = _pick_tile(T, (512, 256, 128))

    def q_index(b, h, qi, ki):
        return (b, h, qi, 0)

    def kv_index(b, h, qi, ki):
        # Clamp skipped (fully masked) kv tiles to the last live tile so the
        # block index repeats and no extra K/V DMA is issued for them.
        last_needed = ((qi + 1) * tq - 1) // tkv
        return (b, h, jnp.minimum(ki, last_needed), 0)

    kernel = functools.partial(_flash_attn_kernel, scale=scale, tq=tq, tkv=tkv)
    return pl.pallas_call(
        kernel,
        out_shape=jax.ShapeDtypeStruct((B, H, T, hd), q.dtype),
        grid=(B, H, T // tq, T // tkv),
        in_specs=[
            pl.BlockSpec((None, None, tq, hd), q_index),
            pl.BlockSpec((None, None, tkv, hd), kv_index),
            pl.BlockSpec((None, None, tkv, hd), kv_index),
        ],
        out_specs=pl.BlockSpec((None, None, tq, hd), q_index),
        scratch_shapes=[
            pltpu.VMEM((tq, 1), jnp.float32),   # running max
            pltpu.VMEM((tq, 1), jnp.float32),   # running sum
            pltpu.VMEM((tq, hd), jnp.float32),  # output accumulator
        ],
        compiler_params=pltpu.CompilerParams(
            dimension_semantics=("parallel", "parallel", "parallel", "arbitrary")),
    )(q, k, v)


# ----------------------------------------------------------------------------
# Full forward pass (wrapper glue: reshape / head split in plain JAX)
# ----------------------------------------------------------------------------
def causal_self_attention(x, params, n_head):
    B, T, C = x.shape
    hd = C // n_head

    # c_attn (torch nn.Linear weights are (out,in); pass pre-transposed so the
    # kernel contracts without an in-kernel transpose).
    qkv = linear(x.reshape(B * T, C), params["w_attn"].T, params["b_attn"])
    qkv = qkv.reshape(B, T, 3, n_head, hd)
    # TODO(synk): when hd is a multiple of 128, fuse this head split/transpose
    # into the attention BlockSpec index_maps (read head columns straight from
    # the (B, T, 3C) buffer) to drop these XLA copies.
    qkv = qkv.transpose(2, 0, 3, 1, 4)          # (3, B, H, T, hd)
    q, k, v = qkv[0], qkv[1], qkv[2]

    y = flash_causal_attention(q, k, v)         # (B, H, T, hd)
    y = y.transpose(0, 2, 1, 3).reshape(B * T, C)

    # c_proj.  TODO(synk): attn_dropout / resid_dropout omitted (eval, p=0).
    out = linear(y, params["w_proj"].T, params["b_proj"])
    return out.reshape(B, T, C)


# ----------------------------------------------------------------------------
# Pure-JAX reference for correctness checking
# ----------------------------------------------------------------------------
def _reference(x, params, n_head):
    B, T, C = x.shape
    hd = C // n_head
    qkv = x @ params["w_attn"].T + params["b_attn"]
    q, k, v = jnp.split(qkv, 3, axis=2)
    q = q.reshape(B, T, n_head, hd).transpose(0, 2, 1, 3)
    k = k.reshape(B, T, n_head, hd).transpose(0, 2, 1, 3)
    v = v.reshape(B, T, n_head, hd).transpose(0, 2, 1, 3)
    s = jnp.einsum("bhqd,bhkd->bhqk", q, k) / math.sqrt(hd)
    mask = jnp.tril(jnp.ones((T, T), dtype=bool))
    s = jnp.where(mask[None, None], s, -jnp.inf)
    att = jax.nn.softmax(s, axis=-1)
    y = jnp.einsum("bhqk,bhkd->bhqd", att, v)
    y = y.transpose(0, 2, 1, 3).reshape(B, T, C)
    return y @ params["w_proj"].T + params["b_proj"]


if __name__ == "__main__":
    # Config: n_embd=32, n_head=4, seq=8, batch=2, bias=True, dropout=0.
    B, T, C, n_head = 2, 8, 32, 4

    key = jax.random.PRNGKey(0)
    k1, k2, k3, k4, k5 = jax.random.split(key, 5)
    params = {
        "w_attn": jax.random.normal(k1, (3 * C, C), jnp.float32) * 0.02,
        "b_attn": jax.random.normal(k2, (3 * C,), jnp.float32) * 0.02,
        "w_proj": jax.random.normal(k3, (C, C), jnp.float32) * 0.02,
        "b_proj": jax.random.normal(k4, (C,), jnp.float32) * 0.02,
    }
    x = jax.random.normal(k5, (B, T, C), jnp.float32)

    ref = _reference(x, params, n_head)

    # f32 run (approx reciprocal -> slightly relaxed tolerance).
    out = causal_self_attention(x, params, n_head)
    out = jax.block_until_ready(out)
    assert out.shape == (B, T, C)
    assert jnp.allclose(out, ref, atol=2e-3, rtol=2e-3), "f32 mismatch vs reference"

    # bf16 run (MXU-native operands, f32 accumulation).
    x_bf = x.astype(jnp.bfloat16)
    params_bf = {n: w.astype(jnp.bfloat16) for n, w in params.items()}
    out_bf = causal_self_attention(x_bf, params_bf, n_head)
    out_bf = jax.block_until_ready(out_bf)
    assert out_bf.shape == (B, T, C)
    assert jnp.allclose(out_bf.astype(jnp.float32), ref, atol=5e-2, rtol=5e-2), \
        "bf16 mismatch vs reference"

    print("KERNEL_OK")
</pallas_src>

<mosaic_0001>
module attributes {stable_mosaic.version = 11 : i64} {
  func.func @_linear_kernel(%arg0: i32, %arg1: i32, %arg2: i32, %arg3: memref<16x32xf32, #tpu.memory_space<vmem>>, %arg4: memref<32x96xf32, #tpu.memory_space<vmem>>, %arg5: memref<1x96xf32, #tpu.memory_space<vmem>>, %arg6: memref<16x96xf32, #tpu.memory_space<vmem>>, %arg7: memref<16x96xf32, #tpu.memory_space<vmem>>) attributes {dimension_semantics = [#tpu.dimension_semantics<parallel>, #tpu.dimension_semantics<parallel>, #tpu.dimension_semantics<arbitrary>], iteration_bounds = array<i64: 1, 1, 1>, scalar_prefetch = 0 : i64, scratch_operands = 1 : i64, tpu.core_type = #tpu.core_type<tc>, window_params = [{transform_indices = @transform_0, window_bounds = array<i64: 16, 32>}, {transform_indices = @transform_1, window_bounds = array<i64: 32, 96>}, {transform_indices = @transform_2, window_bounds = array<i64: 1, 96>}, {transform_indices = @transform_3, window_bounds = array<i64: 16, 96>}]} {
    %c0_i32 = arith.constant 0 : i32
    %0 = arith.cmpi eq, %arg2, %c0_i32 : i32
    %1 = arith.extui %0 : i1 to i32
    %c0_i32_0 = arith.constant 0 : i32
    %2 = arith.cmpi ne, %1, %c0_i32_0 : i32
    scf.if %2 {
      %cst_10 = arith.constant 0.000000e+00 : f32
      %12 = vector.broadcast %cst_10 : f32 to vector<16x96xf32>
      %c0_11 = arith.constant 0 : index
      %c0_12 = arith.constant 0 : index
      %13 = vector.load %arg7[%c0_11, %c0_12] : memref<16x96xf32, #tpu.memory_space<vmem>>, vector<16x96xf32>
      tpu.vector_store %arg7[%c0_11, %c0_12], %12 {strides = array<i32>} : memref<16x96xf32, #tpu.memory_space<vmem>>, vector<16x96xf32>,
    } else {
    }
    %c0 = arith.constant 0 : index
    %c0_1 = arith.constant 0 : index
    %3 = vector.load %arg7[%c0, %c0_1] : memref<16x96xf32, #tpu.memory_space<vmem>>, vector<16x96xf32>
    %c0_2 = arith.constant 0 : index
    %c0_3 = arith.constant 0 : index
    %4 = vector.load %arg3[%c0_2, %c0_3] : memref<16x32xf32, #tpu.memory_space<vmem>>, vector<16x32xf32>
    %c0_4 = arith.constant 0 : index
    %c0_5 = arith.constant 0 : index
    %5 = vector.load %arg4[%c0_4, %c0_5] : memref<32x96xf32, #tpu.memory_space<vmem>>, vector<32x96xf32>
    %cst = arith.constant dense<0.000000e+00> : vector<16x96xf32>
    %6 = tpu.matmul %4, %5, %cst {dimension_numbers = #tpu.dot_dimension_numbers<[1], [0], [0], [1], [0, 0, 1, 1], [], []>} : vector<16x32xf32>, vector<32x96xf32>, vector<16x96xf32> -> vector<16x96xf32>
    %7 = arith.addf %3, %6 : vector<16x96xf32>
    %c0_6 = arith.constant 0 : index
    %c0_7 = arith.constant 0 : index
    %8 = vector.load %arg7[%c0_6, %c0_7] : memref<16x96xf32, #tpu.memory_space<vmem>>, vector<16x96xf32>
    tpu.vector_store %arg7[%c0_6, %c0_7], %7 {strides = array<i32>} : memref<16x96xf32, #tpu.memory_space<vmem>>, vector<16x96xf32>,
    %c0_i32_8 = arith.constant 0 : i32
    %9 = arith.cmpi eq, %arg2, %c0_i32_8 : i32
    %10 = arith.extui %9 : i1 to i32
    %c0_i32_9 = arith.constant 0 : i32
    %11 = arith.cmpi ne, %10, %c0_i32_9 : i32
    scf.if %11 {
      %c0_10 = arith.constant 0 : index
      %c0_11 = arith.constant 0 : index
      %12 = vector.load %arg7[%c0_10, %c0_11] : memref<16x96xf32, #tpu.memory_space<vmem>>, vector<16x96xf32>
      %c0_12 = arith.constant 0 : index
      %c0_13 = arith.constant 0 : index
      %13 = vector.load %arg5[%c0_12, %c0_13] : memref<1x96xf32, #tpu.memory_space<vmem>>, vector<1x96xf32>
      %14 = vector.broadcast %13 : vector<1x96xf32> to vector<16x96xf32>
      %15 = arith.addf %12, %14 : vector<16x96xf32>
      %c0_14 = arith.constant 0 : index
      %c0_15 = arith.constant 0 : index
      %16 = vector.load %arg6[%c0_14, %c0_15] : memref<16x96xf32, #tpu.memory_space<vmem>>, vector<16x96xf32>
      tpu.vector_store %arg6[%c0_14, %c0_15], %15 {strides = array<i32>} : memref<16x96xf32, #tpu.memory_space<vmem>>, vector<16x96xf32>,
    } else {
    }
    return
  }
  func.func @transform_0(%arg0: i32, %arg1: i32, %arg2: i32) -> (i32, i32) {
    %c0_i32 = arith.constant 0 : i32
    return %arg0, %arg2 : i32, i32
  }
  func.func @transform_1(%arg0: i32, %arg1: i32, %arg2: i32) -> (i32, i32) {
    %c0_i32 = arith.constant 0 : i32
    return %arg2, %arg1 : i32, i32
  }
  func.func @transform_2(%arg0: i32, %arg1: i32, %arg2: i32) -> (i32, i32) {
    %c0_i32 = arith.constant 0 : i32
    %c0_i32_0 = arith.constant 0 : i32
    return %c0_i32, %arg1 : i32, i32
  }
  func.func @transform_3(%arg0: i32, %arg1: i32, %arg2: i32) -> (i32, i32) {
    %c0_i32 = arith.constant 0 : i32
    return %arg0, %arg1 : i32, i32
  }
}

</mosaic_0001>

<llo_original>
// kernel: tpu_custom_call.1
$region0: #{tpu_custom_call.1}
  #allocation0 [shape = 'u32[]', space=smem, size = 0x4, offset = 0x4, fixed_abs, tag = 'smem constant byte address 0x4 - core index']
  #allocation1 [shape = 'u32[144,128]{1,0:T(1,128)}', space=vmem, size = 0x12000, scoped, tag = 'internal scratch']
  #allocation2 [shape = 'f32[16,96]{1,0:T(8,128)}', space=vmem, size = 0x2000, scoped, tag = 'scratch operand']
  %s0 = inlined_call_operand.hbm [shape: f32[16,32], index: 0, kind: input, shape index: {}]
  %s1 = inlined_call_operand.hbm [shape: f32[32,96], index: 1, kind: input, shape index: {}]
  %s2 = inlined_call_operand.vmem [shape: f32[1,96], index: 2, kind: input, shape index: {}]
  %s3 = inlined_call_operand.hbm [shape: f32[16,96], index: 3, kind: output, shape index: {}]
  %s4 = sld [smem:[#allocation0]]
  $region38: #{tpu_custom_call.1} parent=0
    _
  %s6 = ssub.s32 1, %s4
  %s7 = scalar_select 0, %s6, %s4
  $region1: #{tpu_custom_call.1} parent=0
    #allocation3 [shape = 'u8[8192]{0}', space=vmem, size = 0x2000, scoped, tag = 'input window, operand 0, single buffered']
    #allocation4 [shape = 's32[1]{0}', space=sflag, size = 0x4, scoped, tag = 'scoped memory for tpu_custom_call.1']
    #allocation5 [shape = 's32[1]{0}', space=sflag, size = 0x4, scoped, tag = 'scoped memory for tpu_custom_call.1']
    #allocation6 [shape = 'u8[16384]{0}', space=vmem, size = 0x4000, scoped, tag = 'input window, operand 1, single buffered']
    #allocation7 [shape = 's32[1]{0}', space=sflag, size = 0x4, scoped, tag = 'scoped memory for tpu_custom_call.1']
    #allocation8 [shape = 'u8[8192]{0}', space=vmem, size = 0x2000, scoped, tag = 'output window, operand 0, single buffered']
    %8 = vsyncpa [#allocation4], 0
    %9 = vsyncpa [#allocation7], 0
    %10 = vsyncpa [#allocation5], 0
    // Predicated region
    $region2: #{tpu_custom_call.1} parent=1 // pred_check
      _
    $region3: #{tpu_custom_call.1} parent=1 // pred_check_branch
      %12 = sbr.rel (0) target = $region5
    $region4: #{tpu_custom_call.1} parent=1 // pred_region
      %s14 = ssub.s32 256, 256
      %15 = vsyncadd [#allocation4], %s14
      %s16 = sshll.u32 [#allocation3], 4
      %s17 = int_to_ptr.vmem [resolvable:$true] %s16
      %22 = dma.hbm_to_vmem [thread:$0]  %s0, 256, %s17, [#allocation4], 128, 128, 8
    $region5: #{tpu_custom_call.1} parent=1 // pred_fallthru
      _
    // Predicated region
    $region6: #{tpu_custom_call.1} parent=1 // pred_check
      _
    $region7: #{tpu_custom_call.1} parent=1 // pred_check_branch
      %24 = sbr.rel (0) target = $region9
    $region8: #{tpu_custom_call.1} parent=1 // pred_region
      %s26 = ssub.s32 512, 512
      %27 = vsyncadd [#allocation7], %s26
      %s28 = sshll.u32 [#allocation6], 4
      %s29 = int_to_ptr.vmem [resolvable:$true] %s28
      %34 = dma.hbm_to_vmem [thread:$0]  %s1, 512, %s29, [#allocation7], 128, 128, 8
    $region9: #{tpu_custom_call.1} parent=1 // pred_fallthru
      _
    // Predicated region
    $region10: #{tpu_custom_call.1} parent=1 // pred_check
      _
    $region11: #{tpu_custom_call.1} parent=1 // pred_check_branch
      %36 = sbr.rel (0) target = $region13
    $region12: #{tpu_custom_call.1} parent=1 // pred_region
      _
    $region13: #{tpu_custom_call.1} parent=1 // pred_fallthru
      _
    // Predicated region
    $region14: #{tpu_custom_call.1} parent=1 // pred_check
      _
    $region15: #{tpu_custom_call.1} parent=1 // pred_check_branch
      %38 = sbr.rel (0) target = $region17
    $region16: #{tpu_custom_call.1} parent=1 // pred_region
      %39 = dma.done [#allocation4], 256
    $region17: #{tpu_custom_call.1} parent=1 // pred_fallthru
      _
    // Predicated region
    $region18: #{tpu_custom_call.1} parent=1 // pred_check
      _
    $region19: #{tpu_custom_call.1} parent=1 // pred_check_branch
      %41 = sbr.rel (0) target = $region21
    $region20: #{tpu_custom_call.1} parent=1 // pred_region
      %42 = dma.done [#allocation7], 512
    $region21: #{tpu_custom_call.1} parent=1 // pred_fallthru
      _
    %p43 = scmp.eq.s32.totalorder 0, 0
    // Predicated region
    $region22: #{tpu_custom_call.1} parent=1 // pred_check
      %p44 = pneg %p43
    $region23: #{tpu_custom_call.1} parent=1 // pred_check_branch
      %46 = sbr.rel (%p44) target = $region25
    $region24: #{tpu_custom_call.1} parent=1 // pred_region
      %vm47 = vcmask 785408
      %48 = vst.msk [vmem:[#allocation2] sm:$0xff] %vm47, 0.0
      %49 = vst.msk [vmem:[#allocation2 + $0x8] sm:$0xff] %vm47, 0.0
    $region25: #{tpu_custom_call.1} parent=1 // pred_fallthru
      _
    %v50 = vld [vmem:[#allocation2] sm:$0xff]
    %v51 = vld [vmem:[#allocation2 + $0x8] sm:$0xff]
    %v52 = vld [vmem:[#allocation3] sm:$0xff]
    %v53 = vld [vmem:[#allocation3 + $0x8] sm:$0xff]
    %v54 = vld [vmem:[#allocation6] sm:$0xff]
    %v55 = vld [vmem:[#allocation6 + $0x8] sm:$0xff]
    %v56 = vld [vmem:[#allocation6 + $0x10] sm:$0xff]
    %v57 = vld [vmem:[#allocation6 + $0x18] sm:$0xff]
    %vm58 = vcmask 261120
    %v60 = vsel %vm58, %v52, 0
    %v63 = vsel %vm58, %v53, 0
    %65 = vmatprep.subr.mxu0 0.0
    %66 = vmatpush1.msra.mxu0 0.0
    %67 = vmatprep.subr.mxu0 0.0
    %68 = vmatpush1.msra.mxu0 0.0
    %69 = vmatprep.subr.mxu0 0.0
    %70 = vmatpush1.msra.mxu0 0.0
    %71 = vmatprep.subr.mxu0 0.0
    %72 = vmatpush1.msra.mxu0 0.0
    %73 = vmatprep.subr.mxu0 0.0
    %74 = vmatpush1.msra.mxu0 0.0
    %75 = vmatprep.subr.mxu0 0.0
    %76 = vmatpush1.msra.mxu0 0.0
    %77 = vmatprep.subr.mxu0 0.0
    %78 = vmatpush1.msra.mxu0 0.0
    %79 = vmatprep.subr.mxu0 0.0
    %80 = vmatpush1.msra.mxu0 0.0
    %81 = vmatprep.subr.mxu0 0.0
    %82 = vmatpush1.msra.mxu0 0.0
    %83 = vmatprep.subr.mxu0 0.0
    %84 = vmatpush1.msra.mxu0 0.0
    %85 = vmatprep.subr.mxu0 0.0
    %86 = vmatpush1.msra.mxu0 0.0
    %87 = vmatprep.subr.mxu0 0.0
    %88 = vmatpush1.msra.mxu0 0.0
    %89 = vmatprep.subr.mxu0 0.0
    %90 = vmatpush1.msra.mxu0 %v57
    %91 = vmatprep.subr.mxu0 0.0
    %92 = vmatpush1.msra.mxu0 %v56
    %93 = vmatprep.subr.mxu0 0.0
    %94 = vmatpush1.msra.mxu0 %v55
    %95 = vmatprep.subr.mxu0 0.0
    %96 = vmatpush1.msra.mxu0 %v54
    %97 = vmatprep.subr.mxu0 0.0
    %98 = vmatpush2.msra.mxu0 0.0
    %99 = vmatprep.subr.mxu0 0.0
    %100 = vmatpush2.msra.mxu0 0.0
    %101 = vmatprep.subr.mxu0 0.0
    %102 = vmatpush2.msra.mxu0 0.0
    %103 = vmatprep.subr.mxu0 0.0
    %104 = vmatpush2.msra.mxu0 0.0
    %105 = vmatprep.subr.mxu0 0.0
    %106 = vmatpush2.msra.mxu0 0.0
    %107 = vmatprep.subr.mxu0 0.0
    %108 = vmatpush2.msra.mxu0 0.0
    %109 = vmatprep.subr.mxu0 0.0
    %110 = vmatpush2.msra.mxu0 0.0
    %111 = vmatprep.subr.mxu0 0.0
    %112 = vmatpush2.msra.mxu0 0.0
    %113 = vmatprep.subr.mxu0 0.0
    %114 = vmatpush2.msra.mxu0 0.0
    %115 = vmatprep.subr.mxu0 0.0
    %116 = vmatpush2.msra.mxu0 0.0
    %117 = vmatprep.subr.mxu0 0.0
    %118 = vmatpush2.msra.mxu0 0.0
    %119 = vmatprep.subr.mxu0 0.0
    %120 = vmatpush2.msra.mxu0 0.0
    %121 = vmatprep.subr.mxu0 0.0
    %122 = vmatpush2.msra.mxu0 0.0
    %123 = vmatprep.subr.mxu0 0.0
    %124 = vmatpush2.msra.mxu0 0.0
    %125 = vmatprep.subr.mxu0 0.0
    %126 = vmatpush2.msra.mxu0 0.0
    %127 = vmatprep.subr.mxu0 0.0
    %128 = vmatpush2.msra.mxu0 0.0
    %129 = vmatprep.mubr.f32.mxu0 0.0
    %130 = vmatmul.mubr.f32.gmra.mxu0 %v60
    %v131 = vpop.f32.mrf.mxu0
    %v132 = vadd.f32 0.0, %v131
    %v133 = vpop.f32.mrf.mxu0
    %134 = vmatprep.mubr.f32.mxu0 0.0
    %135 = vmatmul.mubr.f32.gmra.mxu0 %v63
    %v136 = vpop.f32.mrf.mxu0
    %v137 = vadd.f32 0.0, %v136
    %v138 = vpop.f32.mrf.mxu0
    %139 = vdwg.mxu0
    %v140 = vadd.f32 %v50, %v132
    %v141 = vadd.f32 %v51, %v137
    %vm142 = vcmask 785408
    %143 = vst.msk [vmem:[#allocation2] sm:$0xff] %vm142, %v140
    %144 = vst.msk [vmem:[#allocation2 + $0x8] sm:$0xff] %vm142, %v141
    // Predicated region
    $region26: #{tpu_custom_call.1} parent=1 // pred_check
      %p145 = pneg %p43
    $region27: #{tpu_custom_call.1} parent=1 // pred_check_branch
      %147 = sbr.rel (%p145) target = $region29
    $region28: #{tpu_custom_call.1} parent=1 // pred_region
      %v148 = vld [vmem:[#allocation2] sm:$0xff]
      %v149 = vld [vmem:[#allocation2 + $0x8] sm:$0xff]
      %v150 = vld [vmem:[%s2] sm:$0x1]
      %v152 = vlaneseq
      %v153 = vshrl.u32 %v152, 7
      %v154 = vsub.s32 0, %v153
      %v155 = vrot.slane %v150, %v154
      %v157 = vadd.f32 %v148, %v155
      %v158 = vadd.f32 %v149, %v155
      %159 = vst.msk [vmem:[#allocation8] sm:$0xff] %vm142, %v157
      %160 = vst.msk [vmem:[#allocation8 + $0x8] sm:$0xff] %vm142, %v158
    $region29: #{tpu_custom_call.1} parent=1 // pred_fallthru
      _
    // Predicated region
    $region30: #{tpu_custom_call.1} parent=1 // pred_check
      _
    $region31: #{tpu_custom_call.1} parent=1 // pred_check_branch
      %162 = sbr.rel (0) target = $region33
    $region32: #{tpu_custom_call.1} parent=1 // pred_region
      %s164 = ssub.s32 256, 256
      %165 = vsyncadd [#allocation5], %s164
      %s166 = sshll.u32 [#allocation8], 4
      %s167 = int_to_ptr.vmem [resolvable:$true] %s166
      %172 = dma.vmem_to_hbm [thread:$0]  %s167, 256, %s3, [#allocation5], 128, 128, 8
    $region33: #{tpu_custom_call.1} parent=1 // pred_fallthru
      _
    // Predicated region
    $region34: #{tpu_custom_call.1} parent=1 // pred_check
      _
    $region35: #{tpu_custom_call.1} parent=1 // pred_check_branch
      %174 = sbr.rel (0) target = $region37
    $region36: #{tpu_custom_call.1} parent=1 // pred_region
      %175 = dma.done [#allocation5], 256
    $region37: #{tpu_custom_call.1} parent=1 // pred_fallthru
      _
    %176 = vsyncpa [#allocation4], 1
    %177 = vsyncpa [#allocation7], 1
    %178 = vsyncpa [#allocation5], 1

</llo_original>
